<compile_context>
chip_gen: v7x
topology: tpu7x:2x2x1
jax: 0.10.0
libtpu: 0.0.40
codegen_flags: <defaults>
</compile_context>

<pallas_src>
import jax
import jax.numpy as jnp
from jax.experimental import pallas as pl
from jax.experimental.pallas import tpu as pltpu


def _indexer_kernel(x_ref, mf_ref, mb_ref, fg_ref, bg_ref):
    # x_ref: (TC, THW); mf_ref / mb_ref: (1, THW) or (TC, THW), native dtype.
    x = x_ref[...]
    mf = mf_ref[...]
    mb = mb_ref[...]
    fg_ref[...] = (x * mf).astype(fg_ref.dtype)
    bg_ref[...] = (x * mb).astype(bg_ref.dtype)


def _round_up(x, m):
    return ((x + m - 1) // m) * m


def _choose_tiles(C, HW, itemsize, target_bytes=2 << 20, tc_cap=256, thw_cap=4096):
    """Pick (TC, THW) so TC*THW*itemsize approaches target_bytes.

    Lane tile is a multiple of 128 (or the whole HW dim when HW <= 128);
    sublane tile is a multiple of the packing granule (or the whole C dim when
    C is smaller than it).  THW is grown first, then TC, so small-C shapes
    compensate with wide lane tiles and the grid keeps steps for dual-TC chips.
    """
    sub = {4: 8, 2: 16, 1: 32}.get(itemsize, 8)

    if HW <= 128:
        thw = thw_max = HW          # full dim: allowed by the (8,128) rule
    else:
        thw = 128
        thw_max = min(_round_up(HW, 128), thw_cap)

    if C <= sub:
        tc = tc_max = C             # full dim: allowed by the (8,128) rule
    else:
        tc = sub
        tc_max = min(_round_up(C, sub), _round_up(tc_cap, sub))

    while thw < thw_max and tc * min(thw * 2, thw_max) * itemsize <= target_bytes:
        thw = min(thw * 2, thw_max)
    while tc < tc_max and min(tc * 2, tc_max) * thw * itemsize <= target_bytes:
        tc = min(tc * 2, tc_max)
    return tc, thw


def indexer_forward(X, M_f, M_b):
    """X: (B, C, H, W); M_f, M_b: (B, 1, H, W) or (B, C, H, W)."""
    B, C, H, W = X.shape
    HW = H * W

    Cm_f = M_f.shape[1]
    Cm_b = M_b.shape[1]
    assert Cm_f in (1, C) and Cm_b in (1, C)

    itemsize = jnp.dtype(X.dtype).itemsize
    TC, THW = _choose_tiles(C, HW, itemsize)

    # Flatten spatial dims; keep mask dtype native (cast happens on the VPU
    # inside the kernel, avoiding an extra XLA read/write pass over the masks).
    x2 = X.reshape(B, C, HW)
    mf2 = M_f.reshape(B, Cm_f, HW)
    mb2 = M_b.reshape(B, Cm_b, HW)

    # C innermost so single-channel mask blocks are reused across C tiles.
    grid = (B, pl.cdiv(HW, THW), pl.cdiv(C, TC))

    x_spec = pl.BlockSpec((pl.Squeezed(), TC, THW), lambda b, h, c: (b, c, h))
    mf_spec = (pl.BlockSpec((pl.Squeezed(), 1, THW), lambda b, h, c: (b, 0, h))
               if Cm_f == 1 else x_spec)
    mb_spec = (pl.BlockSpec((pl.Squeezed(), 1, THW), lambda b, h, c: (b, 0, h))
               if Cm_b == 1 else x_spec)
    out_spec = x_spec

    out_shapes = (
        jax.ShapeDtypeStruct((B, C, HW), X.dtype),
        jax.ShapeDtypeStruct((B, C, HW), X.dtype),
    )

    mf_item = jnp.dtype(M_f.dtype).itemsize
    mb_item = jnp.dtype(M_b.dtype).itemsize
    cost = pl.CostEstimate(
        flops=2 * B * C * HW,
        transcendentals=0,
        bytes_accessed=3 * B * C * HW * itemsize
        + B * Cm_f * HW * mf_item
        + B * Cm_b * HW * mb_item,
    )

    fg, bg = pl.pallas_call(
        _indexer_kernel,
        out_shape=out_shapes,
        grid_spec=pltpu.PrefetchScalarGridSpec(
            num_scalar_prefetch=0,
            grid=grid,
            in_specs=[x_spec, mf_spec, mb_spec],
            out_specs=[out_spec, out_spec],
        ),
        compiler_params=pltpu.CompilerParams(
            dimension_semantics=("parallel", "parallel", "parallel"),
            # Large enough for ~2 MiB blocks double-buffered across 5 arrays
            # (<~30 MiB worst case), small enough for v7x's 64 MiB VMEM.
            vmem_limit_bytes=48 << 20,
        ),
        cost_estimate=cost,
    )(x2, mf2, mb2)

    return {
        "foreground_feature": fg.reshape(B, C, H, W),
        "background_feature": bg.reshape(B, C, H, W),
    }


if __name__ == "__main__":
    key = jax.random.PRNGKey(0)
    kx, kf, kb, kc = jax.random.split(key, 4)

    # Test 1: aligned spatial dim (HW = 256), single-channel masks.
    B, C, H, W = 2, 4, 16, 16
    X = jax.random.normal(kx, (B, C, H, W), dtype=jnp.float32)
    M_f = (jax.random.uniform(kf, (B, 1, H, W)) > 0.5).astype(jnp.float32)
    M_b = 1.0 - M_f

    out = indexer_forward(X, M_f, M_b)
    jax.block_until_ready(out)
    assert jnp.allclose(out["foreground_feature"], X * M_f, atol=1e-6)
    assert jnp.allclose(out["background_feature"], X * M_b, atol=1e-6)

    # Test 2: unaligned spatial dim (HW = 49), full-channel masks — exercises
    # the boundary-masked (no-padding) path on the lane axis.
    H2, W2 = 7, 7
    X2 = jax.random.normal(kb, (B, C, H2, W2), dtype=jnp.float32)
    M_f2 = (jax.random.uniform(kf, (B, C, H2, W2)) > 0.5).astype(jnp.float32)
    M_b2 = 1.0 - M_f2

    out2 = indexer_forward(X2, M_f2, M_b2)
    jax.block_until_ready(out2)
    assert jnp.allclose(out2["foreground_feature"], X2 * M_f2, atol=1e-6)
    assert jnp.allclose(out2["background_feature"], X2 * M_b2, atol=1e-6)

    # Test 3: C not a multiple of the sublane tile (C = 12), mixed mask shapes
    # — exercises the boundary-masked path on the sublane axis.
    C3, H3, W3 = 12, 16, 24
    X3 = jax.random.normal(kc, (B, C3, H3, W3), dtype=jnp.float32)
    M_f3 = (jax.random.uniform(kf, (B, 1, H3, W3)) > 0.5).astype(jnp.float32)
    M_b3 = (jax.random.uniform(kb, (B, C3, H3, W3)) > 0.5).astype(jnp.float32)

    out3 = indexer_forward(X3, M_f3, M_b3)
    jax.block_until_ready(out3)
    assert jnp.allclose(out3["foreground_feature"], X3 * M_f3, atol=1e-6)
    assert jnp.allclose(out3["background_feature"], X3 * M_b3, atol=1e-6)

    print("KERNEL_OK")
</pallas_src>

<mosaic_0001>
module attributes {stable_mosaic.version = 11 : i64} {
  func.func @_indexer_kernel(%arg0: i32, %arg1: i32, %arg2: i32, %arg3: memref<1x4x256xf32, #tpu.memory_space<vmem>>, %arg4: memref<1x1x256xf32, #tpu.memory_space<vmem>>, %arg5: memref<1x1x256xf32, #tpu.memory_space<vmem>>, %arg6: memref<1x4x256xf32, #tpu.memory_space<vmem>>, %arg7: memref<1x4x256xf32, #tpu.memory_space<vmem>>) attributes {dimension_semantics = [#tpu.dimension_semantics<parallel>, #tpu.dimension_semantics<parallel>, #tpu.dimension_semantics<parallel>], iteration_bounds = array<i64: 2, 1, 1>, scalar_prefetch = 0 : i64, scratch_operands = 0 : i64, tpu.core_type = #tpu.core_type<tc>, window_params = [{transform_indices = @transform_0, window_bounds = array<i64: 1, 4, 256>}, {transform_indices = @transform_1, window_bounds = array<i64: 1, 1, 256>}, {transform_indices = @transform_2, window_bounds = array<i64: 1, 1, 256>}, {transform_indices = @transform_3, window_bounds = array<i64: 1, 4, 256>}, {transform_indices = @transform_4, window_bounds = array<i64: 1, 4, 256>}]} {
    %c0 = arith.constant 0 : index
    %c0_0 = arith.constant 0 : index
    %c0_1 = arith.constant 0 : index
    %0 = vector.load %arg3[%c0, %c0_0, %c0_1] : memref<1x4x256xf32, #tpu.memory_space<vmem>>, vector<1x4x256xf32>
    %1 = vector.shape_cast %0 : vector<1x4x256xf32> to vector<4x256xf32>
    %c0_2 = arith.constant 0 : index
    %c0_3 = arith.constant 0 : index
    %c0_4 = arith.constant 0 : index
    %2 = vector.load %arg4[%c0_2, %c0_3, %c0_4] : memref<1x1x256xf32, #tpu.memory_space<vmem>>, vector<1x1x256xf32>
    %3 = vector.shape_cast %2 : vector<1x1x256xf32> to vector<1x256xf32>
    %c0_5 = arith.constant 0 : index
    %c0_6 = arith.constant 0 : index
    %c0_7 = arith.constant 0 : index
    %4 = vector.load %arg5[%c0_5, %c0_6, %c0_7] : memref<1x1x256xf32, #tpu.memory_space<vmem>>, vector<1x1x256xf32>
    %5 = vector.shape_cast %4 : vector<1x1x256xf32> to vector<1x256xf32>
    %6 = vector.broadcast %3 : vector<1x256xf32> to vector<4x256xf32>
    %7 = arith.mulf %1, %6 : vector<4x256xf32>
    %c0_8 = arith.constant 0 : index
    %c0_9 = arith.constant 0 : index
    %c0_10 = arith.constant 0 : index
    %8 = vector.load %arg6[%c0_8, %c0_9, %c0_10] : memref<1x4x256xf32, #tpu.memory_space<vmem>>, vector<1x4x256xf32>
    %9 = vector.shape_cast %8 : vector<1x4x256xf32> to vector<4x256xf32>
    %10 = vector.shape_cast %7 : vector<4x256xf32> to vector<1x4x256xf32>
    tpu.vector_store %arg6[%c0_8, %c0_9, %c0_10], %10 {strides = array<i32>} : memref<1x4x256xf32, #tpu.memory_space<vmem>>, vector<1x4x256xf32>,
    %11 = vector.broadcast %5 : vector<1x256xf32> to vector<4x256xf32>
    %12 = arith.mulf %1, %11 : vector<4x256xf32>
    %c0_11 = arith.constant 0 : index
    %c0_12 = arith.constant 0 : index
    %c0_13 = arith.constant 0 : index
    %13 = vector.load %arg7[%c0_11, %c0_12, %c0_13] : memref<1x4x256xf32, #tpu.memory_space<vmem>>, vector<1x4x256xf32>
    %14 = vector.shape_cast %13 : vector<1x4x256xf32> to vector<4x256xf32>
    %15 = vector.shape_cast %12 : vector<4x256xf32> to vector<1x4x256xf32>
    tpu.vector_store %arg7[%c0_11, %c0_12, %c0_13], %15 {strides = array<i32>} : memref<1x4x256xf32, #tpu.memory_space<vmem>>, vector<1x4x256xf32>,
    return
  }
  func.func @transform_0(%arg0: i32, %arg1: i32, %arg2: i32) -> (i32, i32, i32) {
    %c0_i32 = arith.constant 0 : i32
    return %arg0, %arg2, %arg1 : i32, i32, i32
  }
  func.func @transform_1(%arg0: i32, %arg1: i32, %arg2: i32) -> (i32, i32, i32) {
    %c0_i32 = arith.constant 0 : i32
    %c0_i32_0 = arith.constant 0 : i32
    return %arg0, %c0_i32, %arg1 : i32, i32, i32
  }
  func.func @transform_2(%arg0: i32, %arg1: i32, %arg2: i32) -> (i32, i32, i32) {
    %c0_i32 = arith.constant 0 : i32
    %c0_i32_0 = arith.constant 0 : i32
    return %arg0, %c0_i32, %arg1 : i32, i32, i32
  }
  func.func @transform_3(%arg0: i32, %arg1: i32, %arg2: i32) -> (i32, i32, i32) {
    %c0_i32 = arith.constant 0 : i32
    return %arg0, %arg2, %arg1 : i32, i32, i32
  }
  func.func @transform_4(%arg0: i32, %arg1: i32, %arg2: i32) -> (i32, i32, i32) {
    %c0_i32 = arith.constant 0 : i32
    return %arg0, %arg2, %arg1 : i32, i32, i32
  }
}

</mosaic_0001>

<llo_original>
// kernel: tpu_custom_call.1
$region0: #{tpu_custom_call.1}
  #allocation0 [shape = 'u32[]', space=smem, size = 0x4, offset = 0x4, fixed_abs, tag = 'smem constant byte address 0x4 - core index']
  #allocation1 [shape = 'u32[144,128]{1,0:T(1,128)}', space=vmem, size = 0x12000, scoped, tag = 'internal scratch']
  %s0 = inlined_call_operand.hbm [shape: f32[2,4,256], index: 0, kind: input, shape index: {}]
  %s1 = inlined_call_operand.hbm [shape: f32[2,1,256], index: 1, kind: input, shape index: {}]
  %s2 = inlined_call_operand.vmem [shape: f32[2,1,256], index: 2, kind: input, shape index: {}]
  %s3 = inlined_call_operand.hbm [shape: f32[2,4,256], index: 3, kind: output, shape index: {0}]
  %s4 = inlined_call_operand.hbm [shape: f32[2,4,256], index: 4, kind: output, shape index: {1}]
  %5 = xla_tuple %s3, %s4
  %s6 = sld [smem:[#allocation0]]
  $region61: #{tpu_custom_call.1} parent=0
    _
  %s8 = ssub.s32 1, %s6
  %s9 = scalar_select 0, %s8, %s6
  $region1: #{tpu_custom_call.1} parent=0
    #allocation2 [shape = 'u8[8192]{0}', space=vmem, size = 0x2000, scoped, tag = 'input window, operand 0']
    #allocation3 [shape = 's32[2]{0}', space=sflag, size = 0x8, scoped, tag = 'scoped memory for tpu_custom_call.1']
    #allocation4 [shape = 's32[2]{0}', space=sflag, size = 0x8, scoped, tag = 'scoped memory for tpu_custom_call.1']
    #allocation5 [shape = 'u8[2048]{0}', space=vmem, size = 0x800, scoped, tag = 'input window, operand 1']
    #allocation6 [shape = 's32[2]{0}', space=sflag, size = 0x8, scoped, tag = 'scoped memory for tpu_custom_call.1']
    #allocation7 [shape = 'u8[8192]{0}', space=vmem, size = 0x2000, scoped, tag = 'output window, operand 0']
    #allocation8 [shape = 'u8[8192]{0}', space=vmem, size = 0x2000, scoped, tag = 'output window, operand 1']
    #allocation9 [shape = 's32[2]{0}', space=sflag, size = 0x8, scoped, tag = 'scoped memory for tpu_custom_call.1']
    %10 = vsyncpa [#allocation3], 0
    %s11 = scalar_lea.sflag [#allocation3], 1
    %12 = vsyncpa %s11, 0
    %13 = vsyncpa [#allocation6], 0
    %s14 = scalar_lea.sflag [#allocation6], 1
    %15 = vsyncpa %s14, 0
    %16 = vsyncpa [#allocation4], 0
    %s17 = scalar_lea.sflag [#allocation4], 1
    %18 = vsyncpa %s17, 0
    %19 = vsyncpa [#allocation9], 0
    %s20 = scalar_lea.sflag [#allocation9], 1
    %21 = vsyncpa %s20, 0
    loop: start=0, step=1, limit=4
    $region2: #{tpu_custom_call.1} parent=1 // loop_pre_header
      _
    $region3: #{tpu_custom_call.1} parent=1 // loop_header
      %s23 = sphi 0, %s27
      %p24 = scmp.ge.s32.totalorder %s23, 4
      %s30 = sphi 0, %s49
      %s31 = sphi 0, %s45
      %s32 = sphi 0, %s41
      %s33 = sphi 0, %s30
      %s34 = sphi 0, %s31
      %s35 = sphi 0, %s32
      %s36 = sphi 0, %s33
      %s37 = sphi 0, %s34
      %s38 = sphi 0, %s35
      %s56 = sphi 0, %s58
      %s59 = sphi 0, %s56
      %s60 = sphi 0, %s59
      %s76 = sphi 0, %s60
      %s84 = sphi 0, %s86
      %s87 = sphi 0, %s84
      %s88 = sphi 0, %s87
      %s104 = sphi 0, %s88
      %s112 = sphi 0, %s114
      %s115 = sphi 0, %s112
      %s116 = sphi 0, %s115
      %s132 = sphi 0, %s116
      %s142 = sphi 0, %s144
      %s145 = sphi 0, %s142
      %s146 = sphi 0, %s145
      %s162 = sphi 0, %s146
      %s172 = sphi 0, %s174
      %s175 = sphi 0, %s172
      %s176 = sphi 0, %s175
      %s192 = sphi 0, %s176
    $region4: #{tpu_custom_call.1} parent=1 // loop_header_branch
      %26 = sbr.rel (%p24) target = $region8
    $region5: #{tpu_custom_call.1} parent=1 // loop_body
      %s28 = ssub.s32 %s23, 1
      %s29 = ssub.s32 %s23, 2
      %s39 = sadd.s32 1, %s32
      %p40 = scmp.ge.s32.totalorder %s39, 1
      %s41 = scalar_select %p40, 0, %s39
      %s42 = sadd.s32 1, %s31
      %s43 = scalar_select %p40, %s42, %s31
      %p44 = scmp.ge.s32.totalorder %s43, 1
      %s45 = scalar_select %p44, 0, %s43
      %s46 = sadd.s32 1, %s30
      %s47 = scalar_select %p44, %s46, %s30
      %p48 = scmp.ge.s32.totalorder %s47, 2
      %s49 = scalar_select %p48, 0, %s47
      %s50 = ssub.s32 %s30, %s49
      %s51 = ssub.s32 %s32, %s41
      %s52 = sor.u32 %s50, %s51
      %s53 = ssub.s32 %s31, %s45
      %s54 = sor.u32 %s52, %s53
      %p55 = scmp.eq.s32.totalorder %s54, 0
      %s57 = sadd.s32 %s56, 1
      %s58 = scalar_select %p55, %s56, %s57
      %p61 = pneg %p55
      %p62 = scmp.eq.s32.totalorder %s23, 1
      %p63 = por %p61, %p62
      %p64 = scmp.ne.s32.totalorder %s56, %s59
      %p65 = scmp.eq.s32.totalorder %s23, 0
      %p66 = por %p64, %p65
      %p67 = scmp.ne.s32.totalorder %s56, %s59
      %p68 = scmp.eq.s32.totalorder %s28, 1
      %p69 = por %p67, %p68
      %p70 = scmp.ne.s32.totalorder %s59, %s60
      %p71 = scmp.eq.s32.totalorder %s28, 0
      %p72 = por %p70, %p71
      %p73 = scmp.ne.s32.totalorder %s59, %s60
      %p74 = scmp.eq.s32.totalorder %s29, 1
      %p75 = por %p73, %p74
      %p77 = scmp.ne.s32.totalorder %s60, %s76
      %p78 = scmp.eq.s32.totalorder %s29, 0
      %p79 = por %p77, %p78
      %s80 = ssub.s32 %s30, %s49
      %s81 = ssub.s32 %s31, %s45
      %s82 = sor.u32 %s80, %s81
      %p83 = scmp.eq.s32.totalorder %s82, 0
      %s85 = sadd.s32 %s84, 1
      %s86 = scalar_select %p83, %s84, %s85
      %p89 = pneg %p83
      %p90 = scmp.eq.s32.totalorder %s23, 1
      %p91 = por %p89, %p90
      %p92 = scmp.ne.s32.totalorder %s84, %s87
      %p93 = scmp.eq.s32.totalorder %s23, 0
      %p94 = por %p92, %p93
      %p95 = scmp.ne.s32.totalorder %s84, %s87
      %p96 = scmp.eq.s32.totalorder %s28, 1
      %p97 = por %p95, %p96
      %p98 = scmp.ne.s32.totalorder %s87, %s88
      %p99 = scmp.eq.s32.totalorder %s28, 0
      %p100 = por %p98, %p99
      %p101 = scmp.ne.s32.totalorder %s87, %s88
      %p102 = scmp.eq.s32.totalorder %s29, 1
      %p103 = por %p101, %p102
      %p105 = scmp.ne.s32.totalorder %s88, %s104
      %p106 = scmp.eq.s32.totalorder %s29, 0
      %p107 = por %p105, %p106
      %s108 = ssub.s32 %s30, %s49
      %s109 = ssub.s32 %s31, %s45
      %s110 = sor.u32 %s108, %s109
      %p111 = scmp.eq.s32.totalorder %s110, 0
      %s113 = sadd.s32 %s112, 1
      %s114 = scalar_select %p111, %s112, %s113
      %p117 = pneg %p111
      %p118 = scmp.eq.s32.totalorder %s23, 1
      %p119 = por %p117, %p118
      %p120 = scmp.ne.s32.totalorder %s112, %s115
      %p121 = scmp.eq.s32.totalorder %s23, 0
      %p122 = por %p120, %p121
      %p123 = scmp.ne.s32.totalorder %s112, %s115
      %p124 = scmp.eq.s32.totalorder %s28, 1
      %p125 = por %p123, %p124
      %p126 = scmp.ne.s32.totalorder %s115, %s116
      %p127 = scmp.eq.s32.totalorder %s28, 0
      %p128 = por %p126, %p127
      %p129 = scmp.ne.s32.totalorder %s115, %s116
      %p130 = scmp.eq.s32.totalorder %s29, 1
      %p131 = por %p129, %p130
      %p133 = scmp.ne.s32.totalorder %s116, %s132
      %p134 = scmp.eq.s32.totalorder %s29, 0
      %p135 = por %p133, %p134
      %s136 = ssub.s32 %s30, %s49
      %s137 = ssub.s32 %s32, %s41
      %s138 = sor.u32 %s136, %s137
      %s139 = ssub.s32 %s31, %s45
      %s140 = sor.u32 %s138, %s139
      %p141 = scmp.eq.s32.totalorder %s140, 0
      %s143 = sadd.s32 %s142, 1
      %s144 = scalar_select %p141, %s142, %s143
      %p147 = pneg %p141
      %p148 = scmp.eq.s32.totalorder %s23, 1
      %p149 = por %p147, %p148
      %p150 = scmp.ne.s32.totalorder %s142, %s145
      %p151 = scmp.eq.s32.totalorder %s23, 0
      %p152 = por %p150, %p151
      %p153 = scmp.ne.s32.totalorder %s142, %s145
      %p154 = scmp.eq.s32.totalorder %s28, 1
      %p155 = por %p153, %p154
      %p156 = scmp.ne.s32.totalorder %s145, %s146
      %p157 = scmp.eq.s32.totalorder %s28, 0
      %p158 = por %p156, %p157
      %p159 = scmp.ne.s32.totalorder %s145, %s146
      %p160 = scmp.eq.s32.totalorder %s29, 1
      %p161 = por %p159, %p160
      %p163 = scmp.ne.s32.totalorder %s146, %s162
      %p164 = scmp.eq.s32.totalorder %s29, 0
      %p165 = por %p163, %p164
      %s166 = ssub.s32 %s30, %s49
      %s167 = ssub.s32 %s32, %s41
      %s168 = sor.u32 %s166, %s167
      %s169 = ssub.s32 %s31, %s45
      %s170 = sor.u32 %s168, %s169
      %p171 = scmp.eq.s32.totalorder %s170, 0
      %s173 = sadd.s32 %s172, 1
      %s174 = scalar_select %p171, %s172, %s173
      %p177 = pneg %p171
      %p178 = scmp.eq.s32.totalorder %s23, 1
      %p179 = por %p177, %p178
      %p180 = scmp.ne.s32.totalorder %s172, %s175
      %p181 = scmp.eq.s32.totalorder %s23, 0
      %p182 = por %p180, %p181
      %p183 = scmp.ne.s32.totalorder %s172, %s175
      %p184 = scmp.eq.s32.totalorder %s28, 1
      %p185 = por %p183, %p184
      %p186 = scmp.ne.s32.totalorder %s175, %s176
      %p187 = scmp.eq.s32.totalorder %s28, 0
      %p188 = por %p186, %p187
      %p189 = scmp.ne.s32.totalorder %s175, %s176
      %p190 = scmp.eq.s32.totalorder %s29, 1
      %p191 = por %p189, %p190
      %p193 = scmp.ne.s32.totalorder %s176, %s192
      %p194 = scmp.eq.s32.totalorder %s29, 0
      %p195 = por %p193, %p194
      %p196 = scmp.le.s32.totalorder 1, %s23
      %p197 = scmp.lt.s32.totalorder %s23, 3
      %p198 = pnand %p196, %p197
      %p199 = pneg %p198
      // Predicated region
      $region9: #{tpu_custom_call.1} parent=5 // pred_check
        _
      $region10: #{tpu_custom_call.1} parent=5 // pred_check_branch
        %201 = sbr.rel (%p198) target = $region12
      $region11: #{tpu_custom_call.1} parent=5 // pred_region
        %s202 = ssub.s32 %s23, 1
      $region12: #{tpu_custom_call.1} parent=5 // pred_fallthru
        _
      %p203 = scmp.lt.s32.totalorder %s23, 2
      // Predicated region
      $region13: #{tpu_custom_call.1} parent=5 // pred_check
        %p204 = pneg %p203
      $region14: #{tpu_custom_call.1} parent=5 // pred_check_branch
        %206 = sbr.rel (%p204) target = $region16
      $region15: #{tpu_custom_call.1} parent=5 // pred_region
        // Predicated region
        $region17: #{tpu_custom_call.1} parent=15 // pred_check
          %p207 = pneg %p66
        $region18: #{tpu_custom_call.1} parent=15 // pred_check_branch
          %209 = sbr.rel (%p207) target = $region20
        $region19: #{tpu_custom_call.1} parent=15 // pred_region
          %s210 = sand.u32 %s56, 1
          %s211 = scalar_lea.sflag [#allocation3], %s210
          %s212 = sand.u32 %s56, 1
          %s213 = smul.addr %s212, 8
          %s214 = scalar_lea.vmem [#allocation2], %s213
          %s215 = smul.u32 2, %s31
          %s217 = ssub.s32 128, 128
          %218 = vsyncadd %s211, %s217
          %s219 = smul.addr %s32, 2
          %s220 = sadd.s32 %s215, %s219
          %s221 = smul.addr %s30, 2
          %s222 = sadd.s32 %s220, %s221
          %s223 = smul.addr %s222, 64
          %s224 = scalar_lea.hbm %s0, %s223
          %s226 = sshll.u32 %s214, 4
          %s227 = int_to_ptr.vmem [resolvable:$true] %s226
          %229 = dma.hbm_to_vmem [thread:$0]  %s224, 128, %s227, %s211
        $region20: #{tpu_custom_call.1} parent=15 // pred_fallthru
          _
        // Predicated region
        $region21: #{tpu_custom_call.1} parent=15 // pred_check
          %p230 = pneg %p94
        $region22: #{tpu_custom_call.1} parent=15 // pred_check_branch
          %232 = sbr.rel (%p230) target = $region24
        $region23: #{tpu_custom_call.1} parent=15 // pred_region
          %s233 = sand.u32 %s84, 1
          %s234 = scalar_lea.sflag [#allocation6], %s233
          %s235 = sand.u32 %s84, 1
          %s236 = smul.addr %s235, 2
          %s237 = scalar_lea.vmem [#allocation5], %s236
          %s238 = smul.u32 2, %s31
          %s240 = ssub.s32 32, 32
          %241 = vsyncadd %s234, %s240
          %s242 = smul.addr %s30, 2
          %s243 = sadd.s32 %s238, %s242
          %s244 = smul.addr %s243, 16
          %s245 = scalar_lea.hbm %s1, %s244
          %s247 = sshll.u32 %s237, 4
          %s248 = int_to_ptr.vmem [resolvable:$true] %s247
          %250 = dma.hbm_to_vmem [thread:$0]  %s245, 32, %s248, %s234
        $region24: #{tpu_custom_call.1} parent=15 // pred_fallthru
          _
        // Predicated region
        $region25: #{tpu_custom_call.1} parent=15 // pred_check
          %p251 = pneg %p122
        $region26: #{tpu_custom_call.1} parent=15 // pred_check_branch
          %253 = sbr.rel (%p251) target = $region28
        $region27: #{tpu_custom_call.1} parent=15 // pred_region
          %s254 = smul.u32 2, %s31
          %p255 = scmp.lt.s32.totalorder %s30, 1
          %s256 = scalar_select %p255, %s30, 1
          %p257 = scmp.lt.s32.totalorder %s254, 1
          %s258 = scalar_select %p257, %s254, 1
          %s259 = smul.addr %s256, 2
          %s260 = sadd.s32 %s258, %s259
          %s261 = scalar_lea.vmem %s2, %s260
          %s262 = smul.u32 2, %s31
        $region28: #{tpu_custom_call.1} parent=15 // pred_fallthru
          _
      $region16: #{tpu_custom_call.1} parent=5 // pred_fallthru
        _
      %p263 = scmp.le.s32.totalorder 1, %s23
      %p264 = scmp.lt.s32.totalorder %s23, 3
      %p265 = pnand %p263, %p264
      %p266 = pneg %p265
      // Predicated region
      $region29: #{tpu_custom_call.1} parent=5 // pred_check
        _
      $region30: #{tpu_custom_call.1} parent=5 // pred_check_branch
        %268 = sbr.rel (%p265) target = $region32
      $region31: #{tpu_custom_call.1} parent=5 // pred_region
        %s269 = ssub.s32 %s23, 1
        %s270 = sand.u32 %s59, 1
        %s271 = scalar_lea.sflag [#allocation3], %s270
        %s272 = sand.u32 %s59, 1
        %s273 = smul.addr %s272, 8
        %s274 = scalar_lea.vmem [#allocation2], %s273
        // Predicated region
        $region33: #{tpu_custom_call.1} parent=31 // pred_check
          %p275 = pneg %p72
        $region34: #{tpu_custom_call.1} parent=31 // pred_check_branch
          %277 = sbr.rel (%p275) target = $region36
        $region35: #{tpu_custom_call.1} parent=31 // pred_region
          %278 = dma.done %s271, 128
        $region36: #{tpu_custom_call.1} parent=31 // pred_fallthru
          _
        %s279 = sand.u32 %s87, 1
        %s280 = scalar_lea.sflag [#allocation6], %s279
        %s281 = sand.u32 %s87, 1
        %s282 = smul.addr %s281, 2
        %s283 = scalar_lea.vmem [#allocation5], %s282
        // Predicated region
        $region37: #{tpu_custom_call.1} parent=31 // pred_check
          %p284 = pneg %p100
        $region38: #{tpu_custom_call.1} parent=31 // pred_check_branch
          %286 = sbr.rel (%p284) target = $region40
        $region39: #{tpu_custom_call.1} parent=31 // pred_region
          %287 = dma.done %s280, 32
        $region40: #{tpu_custom_call.1} parent=31 // pred_fallthru
          _
        %s288 = sand.u32 %s59, 1
        %s289 = scalar_lea.sflag [#allocation3], %s288
        %s290 = sand.u32 %s59, 1
        %s291 = smul.addr %s290, 8
        %s292 = scalar_lea.vmem [#allocation2], %s291
        %p293 = pneg %p72
        %p294 = pneg %p69
        %s295 = sand.u32 %s87, 1
        %s296 = scalar_lea.sflag [#allocation6], %s295
        %s297 = sand.u32 %s87, 1
        %s298 = smul.addr %s297, 2
        %s299 = scalar_lea.vmem [#allocation5], %s298
        %p300 = pneg %p100
        %p301 = pneg %p97
        %s302 = smul.u32 2, %s34
        %p303 = scmp.lt.s32.totalorder %s33, 1
        %s304 = scalar_select %p303, %s33, 1
        %p305 = scmp.lt.s32.totalorder %s302, 1
        %s306 = scalar_select %p305, %s302, 1
        %s307 = smul.addr %s304, 2
        %s308 = sadd.s32 %s306, %s307
        %s309 = scalar_lea.vmem %s2, %s308
        %p310 = pneg %p128
        %p311 = pneg %p125
        %p312 = pneg %p158
        %p313 = pneg %p155
        %s314 = sand.u32 %s145, 1
        %s315 = scalar_lea.sflag [#allocation4], %s314
        %s316 = sand.u32 %s145, 1
        %s317 = smul.addr %s316, 8
        %s318 = scalar_lea.vmem [#allocation7], %s317
        %p319 = pneg %p188
        %p320 = pneg %p185
        %s321 = sand.u32 %s175, 1
        %s322 = scalar_lea.sflag [#allocation9], %s321
        %s323 = sand.u32 %s175, 1
        %s324 = smul.addr %s323, 8
        %s325 = scalar_lea.vmem [#allocation8], %s324
        %s326 = smul.u32 2, %s34
        %s327 = smul.u32 2, %s34
        %s328 = smul.u32 2, %s34
        %p329 = scmp.lt.s32.totalorder %s33, 1
        %s330 = scalar_select %p329, %s33, 1
        %p331 = scmp.lt.s32.totalorder %s328, 1
        %s332 = scalar_select %p331, %s328, 1
        %s333 = smul.addr %s330, 2
        %s334 = sadd.s32 %s332, %s333
        %s335 = scalar_lea.vmem %s2, %s334
        %s336 = smul.u32 2, %s34
        %s337 = smul.u32 2, %s34
        %s338 = smul.u32 2, %s34
        %v339 = vld [vmem:[%s274] sm:$0xff]
        %v340 = vld [vmem:[%s283] sm:$0x3]
        %v341 = vld [vmem:[%s335] sm:$0x3]
        %v343 = vlaneseq
        %v344 = vshrl.u32 %v343, 7
        %v345 = vsub.s32 0, %v344
        %v346 = vrot.slane %v340, %v345
        %v347 = vlaneseq
        %v348 = vshrl.u32 %v347, 7
        %v349 = vsub.s32 1, %v348
        %v350 = vrot.slane %v340, %v349
        %v351 = vcombine.low %v346, %v350
        %v353 = vmul.f32 %v339, %v351
        %354 = vst [vmem:[%s318] sm:$0xff] %v353
        %v356 = vlaneseq
        %v357 = vshrl.u32 %v356, 7
        %v358 = vsub.s32 0, %v357
        %v359 = vrot.slane %v341, %v358
        %v360 = vlaneseq
        %v361 = vshrl.u32 %v360, 7
        %v362 = vsub.s32 1, %v361
        %v363 = vrot.slane %v341, %v362
        %v364 = vcombine.low %v359, %v363
        %v366 = vmul.f32 %v339, %v364
        %367 = vst [vmem:[%s325] sm:$0xff] %v366
        %s368 = sand.u32 %s145, 1
        %s369 = scalar_lea.sflag [#allocation4], %s368
        %s370 = sand.u32 %s145, 1
        %s371 = smul.addr %s370, 8
        %s372 = scalar_lea.vmem [#allocation7], %s371
        %s373 = sand.u32 %s175, 1
        %s374 = scalar_lea.sflag [#allocation9], %s373
        %s375 = sand.u32 %s175, 1
        %s376 = smul.addr %s375, 8
        %s377 = scalar_lea.vmem [#allocation8], %s376
        // Predicated region
        $region41: #{tpu_custom_call.1} parent=31 // pred_check
          %p378 = pneg %p155
        $region42: #{tpu_custom_call.1} parent=31 // pred_check_branch
          %380 = sbr.rel (%p378) target = $region44
        $region43: #{tpu_custom_call.1} parent=31 // pred_region
          %s381 = smul.u32 2, %s34
          %s383 = ssub.s32 128, 128
          %384 = vsyncadd %s369, %s383
          %s385 = smul.addr %s35, 2
          %s386 = sadd.s32 %s381, %s385
          %s387 = smul.addr %s33, 2
          %s388 = sadd.s32 %s386, %s387
          %s389 = smul.addr %s388, 64
          %s390 = scalar_lea.hbm %s3, %s389
          %s392 = sshll.u32 %s372, 4
          %s393 = int_to_ptr.vmem [resolvable:$true] %s392
          %395 = dma.vmem_to_hbm [thread:$0]  %s393, 128, %s390, %s369
        $region44: #{tpu_custom_call.1} parent=31 // pred_fallthru
          _
        // Predicated region
        $region45: #{tpu_custom_call.1} parent=31 // pred_check
          %p396 = pneg %p185
        $region46: #{tpu_custom_call.1} parent=31 // pred_check_branch
          %398 = sbr.rel (%p396) target = $region48
        $region47: #{tpu_custom_call.1} parent=31 // pred_region
          %s399 = smul.u32 2, %s34
          %s401 = ssub.s32 128, 128
          %402 = vsyncadd %s374, %s401
          %s403 = smul.addr %s35, 2
          %s404 = sadd.s32 %s399, %s403
          %s405 = smul.addr %s33, 2
          %s406 = sadd.s32 %s404, %s405
          %s407 = smul.addr %s406, 64
          %s408 = scalar_lea.hbm %s4, %s407
          %s410 = sshll.u32 %s377, 4
          %s411 = int_to_ptr.vmem [resolvable:$true] %s410
          %413 = dma.vmem_to_hbm [thread:$0]  %s411, 128, %s408, %s374
        $region48: #{tpu_custom_call.1} parent=31 // pred_fallthru
          _
      $region32: #{tpu_custom_call.1} parent=5 // pred_fallthru
        _
      %p414 = scmp.le.s32.totalorder 2, %s23
      // Predicated region
      $region49: #{tpu_custom_call.1} parent=5 // pred_check
        %p415 = pneg %p414
      $region50: #{tpu_custom_call.1} parent=5 // pred_check_branch
        %417 = sbr.rel (%p415) target = $region52
      $region51: #{tpu_custom_call.1} parent=5 // pred_region
        %s418 = ssub.s32 %s23, 2
        // Predicated region
        $region53: #{tpu_custom_call.1} parent=51 // pred_check
          %p419 = pneg %p161
        $region54: #{tpu_custom_call.1} parent=51 // pred_check_branch
          %421 = sbr.rel (%p419) target = $region56
        $region55: #{tpu_custom_call.1} parent=51 // pred_region
          %s422 = sand.u32 %s146, 1
          %s423 = scalar_lea.sflag [#allocation4], %s422
          %s424 = sand.u32 %s146, 1
          %s425 = smul.addr %s424, 8
          %s426 = scalar_lea.vmem [#allocation7], %s425
          %427 = dma.done %s423, 128
        $region56: #{tpu_custom_call.1} parent=51 // pred_fallthru
          _
        // Predicated region
        $region57: #{tpu_custom_call.1} parent=51 // pred_check
          %p428 = pneg %p191
        $region58: #{tpu_custom_call.1} parent=51 // pred_check_branch
          %430 = sbr.rel (%p428) target = $region60
        $region59: #{tpu_custom_call.1} parent=51 // pred_region
          %s431 = sand.u32 %s176, 1
          %s432 = scalar_lea.sflag [#allocation9], %s431
          %s433 = sand.u32 %s176, 1
          %s434 = smul.addr %s433, 8
          %s435 = scalar_lea.vmem [#allocation8], %s434
          %436 = dma.done %s432, 128
        $region60: #{tpu_custom_call.1} parent=51 // pred_fallthru
          _
      $region52: #{tpu_custom_call.1} parent=5 // pred_fallthru
        _
    $region6: #{tpu_custom_call.1} parent=1 // loop_footer
      %s27 = sadd.s32 1, %s23
    $region7: #{tpu_custom_call.1} parent=1 // loop_footer_branch
      %22 = sbr.rel target = $region3
    $region8: #{tpu_custom_call.1} parent=1 // loop_exit
      _
    %437 = vsyncpa [#allocation3], 1
    %s438 = scalar_lea.sflag [#allocation3], 1
    %439 = vsyncpa %s438, 1
    %440 = vsyncpa [#allocation6], 1
    %s441 = scalar_lea.sflag [#allocation6], 1
    %442 = vsyncpa %s441, 1
    %443 = vsyncpa [#allocation4], 1
    %s444 = scalar_lea.sflag [#allocation4], 1
    %445 = vsyncpa %s444, 1
    %446 = vsyncpa [#allocation9], 1
    %s447 = scalar_lea.sflag [#allocation9], 1
    %448 = vsyncpa %s447, 1

</llo_original>
